<compile_context>
chip_gen: v5e
topology: v5e:2x2
jax: 0.10.0
libtpu: 0.0.40
codegen_flags: <defaults>
</compile_context>

<pallas_src>
import functools

import jax
import jax.numpy as jnp
from jax.experimental import pallas as pl
from jax.experimental.pallas import tpu as pltpu


def _gelu_exact(x):
    # Matches torch.nn.GELU() default (approximate='none'):
    # 0.5 * x * (1 + erf(x / sqrt(2)))
    return 0.5 * x * (1.0 + jax.lax.erf(x * 0.7071067811865476))


def _mlp_kernel(x_ref, wfc_ref, bfc_ref, wproj_ref, bproj_ref, o_ref, acc_ref):
    # Grid: (M // tm, H // th).
    #   axis 0 ("parallel")  : row tiles of the (M, C) activation slab
    #   axis 1 ("arbitrary") : hidden-dim chunks (N of matmul 1 / K of matmul 2)
    #
    # x_ref:     (tm, C)
    # wfc_ref:   (C, th)     bfc_ref:   (1, th)
    # wproj_ref: (th, C)     bproj_ref: (1, C)
    # acc_ref:   (tm, C) f32 scratch, resident across the H axis.
    k = pl.program_id(1)

    @pl.when(k == 0)
    def _():
        acc_ref[...] = jnp.zeros_like(acc_ref)

    # c_fc chunk: (tm, C) @ (C, th) on the MXU, f32 accumulation.
    # Inputs stay in their native dtype (bf16 weights hit the bf16 MXU path).
    h = jnp.dot(x_ref[...], wfc_ref[...], preferred_element_type=jnp.float32)
    h = h + bfc_ref[...].astype(jnp.float32)

    # GELU (exact / erf form, same as nn.GELU()).
    h = _gelu_exact(h)

    # c_proj partial: (tm, th) @ (th, C), accumulated into f32 scratch.
    acc_ref[...] += jnp.dot(h.astype(wproj_ref.dtype), wproj_ref[...],
                            preferred_element_type=jnp.float32)

    @pl.when(k == pl.num_programs(1) - 1)
    def _():
        out = acc_ref[...] + bproj_ref[...].astype(jnp.float32)
        # TODO(synk): training-mode dropout (pltpu.prng_random_bits mask) not
        # implemented; identity matches eval semantics / dropout=0.0.
        o_ref[...] = out.astype(o_ref.dtype)


@functools.partial(jax.jit, static_argnames=("block_m", "block_h"))
def mlp_pallas(x, w_fc, b_fc, w_proj, b_proj, *, block_m=256, block_h=512):
    """x: (B, T, C) -> (B, T, C). Fused c_fc -> GELU -> c_proj in one kernel."""
    B, T, C = x.shape
    H = w_fc.shape[1]  # 4*C
    M = B * T
    x2d = x.reshape(M, C)

    # MXU-friendly defaults (multiples of 128/256); clamp for small shapes.
    tm = min(block_m, M)
    th = min(block_h, H)
    assert M % tm == 0, (M, tm)
    assert H % th == 0, (H, th)

    b_fc2 = b_fc.reshape(1, H)
    b_proj2 = b_proj.reshape(1, C)

    def _nbytes(a):
        return a.size * a.dtype.itemsize

    cost = pl.CostEstimate(
        flops=4 * M * C * H,            # two (M,C,H) matmuls
        transcendentals=M * H,          # GELU
        bytes_accessed=(_nbytes(x2d) + _nbytes(w_fc) + _nbytes(b_fc2)
                        + _nbytes(w_proj) + _nbytes(b_proj2)
                        + M * C * x.dtype.itemsize),
    )

    out2d = pl.pallas_call(
        _mlp_kernel,
        out_shape=jax.ShapeDtypeStruct((M, C), x.dtype),
        grid_spec=pltpu.PrefetchScalarGridSpec(
            num_scalar_prefetch=0,
            grid=(M // tm, H // th),
            in_specs=[
                pl.BlockSpec((tm, C), lambda i, k: (i, 0)),   # x row tile
                pl.BlockSpec((C, th), lambda i, k: (0, k)),   # W_fc col chunk
                pl.BlockSpec((1, th), lambda i, k: (0, k)),   # b_fc chunk
                pl.BlockSpec((th, C), lambda i, k: (k, 0)),   # W_proj row chunk
                pl.BlockSpec((1, C), lambda i, k: (0, 0)),    # b_proj
            ],
            out_specs=pl.BlockSpec((tm, C), lambda i, k: (i, 0)),
            scratch_shapes=[pltpu.VMEM((tm, C), jnp.float32)],
        ),
        compiler_params=pltpu.CompilerParams(
            dimension_semantics=("parallel", "arbitrary")),
        cost_estimate=cost,
    )(x2d, w_fc, b_fc2, w_proj, b_proj2)

    return out2d.reshape(B, T, C)


def mlp_reference(x, w_fc, b_fc, w_proj, b_proj):
    h = jnp.einsum("btc,ch->bth", x.astype(jnp.float32),
                   w_fc.astype(jnp.float32)) + b_fc.astype(jnp.float32)
    h = 0.5 * h * (1.0 + jax.lax.erf(h / jnp.sqrt(2.0)))
    o = jnp.einsum("bth,hc->btc", h,
                   w_proj.astype(jnp.float32)) + b_proj.astype(jnp.float32)
    return o.astype(x.dtype)


if __name__ == "__main__":
    # cfg: n_embed=32, bias=True, dropout=0.0 (eval semantics); batch=2, seq=8
    B, T, C = 2, 8, 32
    H = 4 * C

    key = jax.random.PRNGKey(0)
    kx, k1, k2, k3, k4 = jax.random.split(key, 5)

    x = jax.random.normal(kx, (B, T, C), dtype=jnp.float32)

    # Deterministic init mimicking nn.Linear default: U(-1/sqrt(fan_in), ...)
    lim_fc = 1.0 / (C ** 0.5)
    lim_pr = 1.0 / (H ** 0.5)
    w_fc = jax.random.uniform(k1, (C, H), minval=-lim_fc, maxval=lim_fc,
                              dtype=jnp.float32)
    b_fc = jax.random.uniform(k2, (H,), minval=-lim_fc, maxval=lim_fc,
                              dtype=jnp.float32)
    w_proj = jax.random.uniform(k3, (H, C), minval=-lim_pr, maxval=lim_pr,
                                dtype=jnp.float32)
    b_proj = jax.random.uniform(k4, (C,), minval=-lim_pr, maxval=lim_pr,
                                dtype=jnp.float32)

    out = mlp_pallas(x, w_fc, b_fc, w_proj, b_proj)
    out = jax.block_until_ready(out)

    ref = mlp_reference(x, w_fc, b_fc, w_proj, b_proj)
    assert out.shape == (B, T, C)
    assert jnp.allclose(out, ref, atol=1e-5, rtol=1e-5), "mismatch vs reference"

    print("KERNEL_OK")
</pallas_src>

<mosaic_0001>
module attributes {stable_mosaic.version = 11 : i64} {
  func.func @_mlp_kernel(%arg0: i32, %arg1: i32, %arg2: memref<16x32xf32, #tpu.memory_space<vmem>>, %arg3: memref<32x128xf32, #tpu.memory_space<vmem>>, %arg4: memref<1x128xf32, #tpu.memory_space<vmem>>, %arg5: memref<128x32xf32, #tpu.memory_space<vmem>>, %arg6: memref<1x32xf32, #tpu.memory_space<vmem>>, %arg7: memref<16x32xf32, #tpu.memory_space<vmem>>, %arg8: memref<16x32xf32, #tpu.memory_space<vmem>>) attributes {dimension_semantics = [#tpu.dimension_semantics<parallel>, #tpu.dimension_semantics<arbitrary>], iteration_bounds = array<i64: 1, 1>, scalar_prefetch = 0 : i64, scratch_operands = 1 : i64, tpu.core_type = #tpu.core_type<tc>, window_params = [{transform_indices = @transform_0, window_bounds = array<i64: 16, 32>}, {transform_indices = @transform_1, window_bounds = array<i64: 32, 128>}, {transform_indices = @transform_2, window_bounds = array<i64: 1, 128>}, {transform_indices = @transform_3, window_bounds = array<i64: 128, 32>}, {pipeline_mode = #tpu.pipeline_mode<synchronous>, transform_indices = @transform_4, window_bounds = array<i64: 1, 32>}, {transform_indices = @transform_5, window_bounds = array<i64: 16, 32>}]} {
    %c0_i32 = arith.constant 0 : i32
    %0 = arith.cmpi eq, %arg1, %c0_i32 : i32
    %1 = arith.extui %0 : i1 to i32
    %c0_i32_0 = arith.constant 0 : i32
    %2 = arith.cmpi ne, %1, %c0_i32_0 : i32
    scf.if %2 {
      %cst_18 = arith.constant 0.000000e+00 : f32
      %25 = vector.broadcast %cst_18 : f32 to vector<16x32xf32>
      %c0_19 = arith.constant 0 : index
      %c0_20 = arith.constant 0 : index
      %26 = vector.load %arg8[%c0_19, %c0_20] : memref<16x32xf32, #tpu.memory_space<vmem>>, vector<16x32xf32>
      tpu.vector_store %arg8[%c0_19, %c0_20], %25 {strides = array<i32>} : memref<16x32xf32, #tpu.memory_space<vmem>>, vector<16x32xf32>,
    } else {
    }
    %c0 = arith.constant 0 : index
    %c0_1 = arith.constant 0 : index
    %3 = vector.load %arg2[%c0, %c0_1] : memref<16x32xf32, #tpu.memory_space<vmem>>, vector<16x32xf32>
    %c0_2 = arith.constant 0 : index
    %c0_3 = arith.constant 0 : index
    %4 = vector.load %arg3[%c0_2, %c0_3] : memref<32x128xf32, #tpu.memory_space<vmem>>, vector<32x128xf32>
    %cst = arith.constant dense<0.000000e+00> : vector<16x128xf32>
    %5 = tpu.matmul %3, %4, %cst {dimension_numbers = #tpu.dot_dimension_numbers<[1], [0], [0], [1], [0, 0, 1, 1], [], []>} : vector<16x32xf32>, vector<32x128xf32>, vector<16x128xf32> -> vector<16x128xf32>
    %c0_4 = arith.constant 0 : index
    %c0_5 = arith.constant 0 : index
    %6 = vector.load %arg4[%c0_4, %c0_5] : memref<1x128xf32, #tpu.memory_space<vmem>>, vector<1x128xf32>
    %7 = vector.broadcast %6 : vector<1x128xf32> to vector<16x128xf32>
    %8 = arith.addf %5, %7 : vector<16x128xf32>
    %cst_6 = arith.constant 5.000000e-01 : f32
    %9 = vector.broadcast %cst_6 : f32 to vector<16x128xf32>
    %10 = arith.mulf %9, %8 : vector<16x128xf32>
    %cst_7 = arith.constant 0.707106769 : f32
    %11 = vector.broadcast %cst_7 : f32 to vector<16x128xf32>
    %12 = arith.mulf %8, %11 : vector<16x128xf32>
    %13 = math.erf %12 : vector<16x128xf32>
    %cst_8 = arith.constant 1.000000e+00 : f32
    %14 = vector.broadcast %cst_8 : f32 to vector<16x128xf32>
    %15 = arith.addf %14, %13 : vector<16x128xf32>
    %16 = arith.mulf %10, %15 : vector<16x128xf32>
    %c0_9 = arith.constant 0 : index
    %c0_10 = arith.constant 0 : index
    %17 = vector.load %arg8[%c0_9, %c0_10] : memref<16x32xf32, #tpu.memory_space<vmem>>, vector<16x32xf32>
    %c0_11 = arith.constant 0 : index
    %c0_12 = arith.constant 0 : index
    %18 = vector.load %arg5[%c0_11, %c0_12] : memref<128x32xf32, #tpu.memory_space<vmem>>, vector<128x32xf32>
    %cst_13 = arith.constant dense<0.000000e+00> : vector<16x32xf32>
    %19 = tpu.matmul %16, %18, %cst_13 {dimension_numbers = #tpu.dot_dimension_numbers<[1], [0], [0], [1], [0, 0, 1, 1], [], []>} : vector<16x128xf32>, vector<128x32xf32>, vector<16x32xf32> -> vector<16x32xf32>
    %20 = arith.addf %17, %19 : vector<16x32xf32>
    %c0_14 = arith.constant 0 : index
    %c0_15 = arith.constant 0 : index
    %21 = vector.load %arg8[%c0_14, %c0_15] : memref<16x32xf32, #tpu.memory_space<vmem>>, vector<16x32xf32>
    tpu.vector_store %arg8[%c0_14, %c0_15], %20 {strides = array<i32>} : memref<16x32xf32, #tpu.memory_space<vmem>>, vector<16x32xf32>,
    %c0_i32_16 = arith.constant 0 : i32
    %22 = arith.cmpi eq, %arg1, %c0_i32_16 : i32
    %23 = arith.extui %22 : i1 to i32
    %c0_i32_17 = arith.constant 0 : i32
    %24 = arith.cmpi ne, %23, %c0_i32_17 : i32
    scf.if %24 {
      %c0_18 = arith.constant 0 : index
      %c0_19 = arith.constant 0 : index
      %25 = vector.load %arg8[%c0_18, %c0_19] : memref<16x32xf32, #tpu.memory_space<vmem>>, vector<16x32xf32>
      %c0_20 = arith.constant 0 : index
      %c0_21 = arith.constant 0 : index
      %26 = vector.load %arg6[%c0_20, %c0_21] : memref<1x32xf32, #tpu.memory_space<vmem>>, vector<1x32xf32>
      %27 = vector.broadcast %26 : vector<1x32xf32> to vector<16x32xf32>
      %28 = arith.addf %25, %27 : vector<16x32xf32>
      %c0_22 = arith.constant 0 : index
      %c0_23 = arith.constant 0 : index
      %29 = vector.load %arg7[%c0_22, %c0_23] : memref<16x32xf32, #tpu.memory_space<vmem>>, vector<16x32xf32>
      tpu.vector_store %arg7[%c0_22, %c0_23], %28 {strides = array<i32>} : memref<16x32xf32, #tpu.memory_space<vmem>>, vector<16x32xf32>,
    } else {
    }
    return
  }
  func.func @transform_0(%arg0: i32, %arg1: i32) -> (i32, i32) {
    %c0_i32 = arith.constant 0 : i32
    %c0_i32_0 = arith.constant 0 : i32
    return %arg0, %c0_i32 : i32, i32
  }
  func.func @transform_1(%arg0: i32, %arg1: i32) -> (i32, i32) {
    %c0_i32 = arith.constant 0 : i32
    %c0_i32_0 = arith.constant 0 : i32
    return %c0_i32, %arg1 : i32, i32
  }
  func.func @transform_2(%arg0: i32, %arg1: i32) -> (i32, i32) {
    %c0_i32 = arith.constant 0 : i32
    %c0_i32_0 = arith.constant 0 : i32
    return %c0_i32, %arg1 : i32, i32
  }
  func.func @transform_3(%arg0: i32, %arg1: i32) -> (i32, i32) {
    %c0_i32 = arith.constant 0 : i32
    %c0_i32_0 = arith.constant 0 : i32
    return %arg1, %c0_i32 : i32, i32
  }
  func.func @transform_4(%arg0: i32, %arg1: i32) -> (i32, i32) {
    %c0_i32 = arith.constant 0 : i32
    %c0_i32_0 = arith.constant 0 : i32
    %c0_i32_1 = arith.constant 0 : i32
    return %c0_i32, %c0_i32_0 : i32, i32
  }
  func.func @transform_5(%arg0: i32, %arg1: i32) -> (i32, i32) {
    %c0_i32 = arith.constant 0 : i32
    %c0_i32_0 = arith.constant 0 : i32
    return %arg0, %c0_i32 : i32, i32
  }
}

</mosaic_0001>

<llo_original>
// kernel: mlp_pallas.1
$region0: #{mlp_pallas.1}
  #allocation0 [shape = 'u32[]', space=smem, size = 0x4, offset = 0x4, fixed_abs, tag = 'smem constant byte address 0x4 - core index']
  #allocation1 [shape = 'u32[72,128]{1,0:T(1,128)}', space=vmem, size = 0x9000, scoped, tag = 'internal scratch']
  #allocation2 [shape = 'f32[16,32]{1,0:T(8,128)}', space=vmem, size = 0x2000, scoped, tag = 'scratch operand']
  %s0 = inlined_call_operand.vmem [shape: f32[16,32], index: 0, kind: input, shape index: {}]
  %s1 = inlined_call_operand.vmem [shape: f32[32,128], index: 1, kind: input, shape index: {}]
  %s2 = inlined_call_operand.vmem [shape: f32[1,128], index: 2, kind: input, shape index: {}]
  %s3 = inlined_call_operand.vmem [shape: f32[128,32], index: 3, kind: input, shape index: {}]
  %s4 = inlined_call_operand.vmem [shape: f32[1,32], index: 4, kind: input, shape index: {}]
  %s5 = inlined_call_operand.hbm [shape: f32[16,32], index: 5, kind: output, shape index: {}]
  %s6 = sld [smem:[#allocation0]]
  $region38: #{mlp_pallas.1} parent=0
    _
  %s8 = ssub.s32 1, %s6
  %s9 = scalar_select 0, %s8, %s6
  $region1: #{mlp_pallas.1} parent=0
    #allocation3 [shape = 'u8[8192]{0}', space=vmem, size = 0x2000, scoped, tag = 'output window, operand 0, single buffered']
    #allocation4 [shape = 's32[1]{0}', space=sflag, size = 0x4, scoped, tag = 'scoped memory for mlp_pallas.1']
    %10 = vsyncpa [#allocation4], 0
    // Predicated region
    $region2: #{mlp_pallas.1} parent=1 // pred_check
      _
    $region3: #{mlp_pallas.1} parent=1 // pred_check_branch
      %12 = sbr.rel (0) target = $region5
    $region4: #{mlp_pallas.1} parent=1 // pred_region
      _
    $region5: #{mlp_pallas.1} parent=1 // pred_fallthru
      _
    // Predicated region
    $region6: #{mlp_pallas.1} parent=1 // pred_check
      _
    $region7: #{mlp_pallas.1} parent=1 // pred_check_branch
      %14 = sbr.rel (0) target = $region9
    $region8: #{mlp_pallas.1} parent=1 // pred_region
      _
    $region9: #{mlp_pallas.1} parent=1 // pred_fallthru
      _
    // Predicated region
    $region10: #{mlp_pallas.1} parent=1 // pred_check
      _
    $region11: #{mlp_pallas.1} parent=1 // pred_check_branch
      %16 = sbr.rel (0) target = $region13
    $region12: #{mlp_pallas.1} parent=1 // pred_region
      _
    $region13: #{mlp_pallas.1} parent=1 // pred_fallthru
      _
    // Predicated region
    $region14: #{mlp_pallas.1} parent=1 // pred_check
      _
    $region15: #{mlp_pallas.1} parent=1 // pred_check_branch
      %18 = sbr.rel (0) target = $region17
    $region16: #{mlp_pallas.1} parent=1 // pred_region
      _
    $region17: #{mlp_pallas.1} parent=1 // pred_fallthru
      _
    // Predicated region
    $region18: #{mlp_pallas.1} parent=1 // pred_check
      _
    $region19: #{mlp_pallas.1} parent=1 // pred_check_branch
      %20 = sbr.rel (0) target = $region21
    $region20: #{mlp_pallas.1} parent=1 // pred_region
      _
    $region21: #{mlp_pallas.1} parent=1 // pred_fallthru
      _
    %p21 = scmp.eq.s32.totalorder 0, 0
    // Predicated region
    $region22: #{mlp_pallas.1} parent=1 // pred_check
      %p22 = pneg %p21
    $region23: #{mlp_pallas.1} parent=1 // pred_check_branch
      %24 = sbr.rel (%p22) target = $region25
    $region24: #{mlp_pallas.1} parent=1 // pred_region
      %vm25 = vcmask 261120
      %26 = vst.msk [vmem:[#allocation2] sm:$0xff] %vm25, 0.0
      %27 = vst.msk [vmem:[#allocation2 + $0x8] sm:$0xff] %vm25, 0.0
    $region25: #{mlp_pallas.1} parent=1 // pred_fallthru
      _
    %v28 = vld [vmem:[%s0] sm:$0xff]
    %v29 = vld [vmem:[%s0 + $0x8] sm:$0xff]
    %v30 = vld [vmem:[%s1] sm:$0xff]
    %v31 = vld [vmem:[%s1 + $0x8] sm:$0xff]
    %v32 = vld [vmem:[%s1 + $0x10] sm:$0xff]
    %v33 = vld [vmem:[%s1 + $0x18] sm:$0xff]
    %v34 = vld [vmem:[%s2] sm:$0x1]
    %v36 = vperm.slane %v34, 0
    %vm38 = vcmask 261120
    %v40 = vsel %vm38, %v28, 0
    %v43 = vsel %vm38, %v29, 0
    %45 = vmatpush.msra.mxu0 0.0
    %46 = vmatpush.msra.mxu0 0.0
    %47 = vmatpush.msra.mxu0 0.0
    %48 = vmatpush.msra.mxu0 0.0
    %49 = vmatpush.msra.mxu0 0.0
    %50 = vmatpush.msra.mxu0 0.0
    %51 = vmatpush.msra.mxu0 0.0
    %52 = vmatpush.msra.mxu0 0.0
    %53 = vmatpush.msra.mxu0 0.0
    %54 = vmatpush.msra.mxu0 0.0
    %55 = vmatpush.msra.mxu0 0.0
    %56 = vmatpush.msra.mxu0 0.0
    %57 = vmatpush.msra.mxu0 %v33
    %58 = vmatpush.msra.mxu0 %v32
    %59 = vmatpush.msra.mxu0 %v31
    %60 = vmatpush.msra.mxu0 %v30
    %61 = vmatmul.f32.gmra.mxu0 %v40
    %v62 = vpop.f32.mrf.mxu0
    %v63 = vadd.f32 %v36, %v62
    %64 = vmatmul.f32.gmra.mxu0 %v43
    %v65 = vpop.f32.mrf.mxu0
    %v66 = vadd.f32 %v36, %v65
    %67 = vdwg.mxu0
    %v68 = vmul.f32 %v63, 0.5
    %v69 = vmul.f32 %v66, 0.5
    %v70 = vmul.f32 %v63, 0.70710677
    %v71 = vmul.f32 %v66, 0.70710677
    %v72 = vmul.f32 %v70, %v70
    %v73 = vmin.f32 16.0, %v72
    %v74 = vmul.f32 %v73, 2.1237322e-06
    %v75 = vadd.f32 %v74, 0.00028619796
    %v76 = vmul.f32 %v73, %v75
    %v77 = vadd.f32 %v76, 0.0036580483
    %v78 = vmul.f32 %v73, %v77
    %v79 = vadd.f32 %v78, 0.05243302
    %v80 = vmul.f32 %v73, %v79
    %v81 = vadd.f32 %v80, 0.18741608
    %v82 = vmul.f32 %v73, %v81
    %v83 = vadd.f32 %v82, 1.1283791
    %v84 = vmul.f32 %v70, %v83
    %v85 = vmul.f32 %v73, 3.8918573e-05
    %v86 = vadd.f32 %v85, 0.001143296
    %v87 = vmul.f32 %v73, %v86
    %v88 = vadd.f32 %v87, 0.014752088
    %v89 = vmul.f32 %v73, %v88
    %v90 = vadd.f32 %v89, 0.112945676
    %v91 = vmul.f32 %v73, %v90
    %v92 = vadd.f32 %v91, 0.4994258
    %v93 = vmul.f32 %v73, %v92
    %v94 = vadd.f32 %v93, 1.0
    %v95 = vrcp.pop %v94
    %v96 = vmul.f32 %v94, %v95
    %v97 = vsub.f32 1.0, %v96
    %v98 = vmul.f32 %v95, %v97
    %v99 = vadd.f32 %v95, %v98
    %vm100 = vweird.f32 %v94
    %vm101 = vweird.f32 %v95
    %vm102 = vmor %vm100, %vm101
    %v103 = vsel %vm102, %v95, %v99
    %v104 = vand.u32 2147483647, %v94
    %vm105 = vcmp.eq.f32.partialorder %v104, 8.507059e+37
    %v106 = vand.u32 %v94, 2147483648
    %v107 = vor.u32 1.1754944e-38, %v106
    %v108 = vsel %vm105, %v107, %v103
    %v109 = vmul.f32 %v84, %v108
    %v110 = vmin.f32 %v109, 1.0
    %v111 = vmax.f32 %v110, -1.0
    %v112 = vmul.f32 %v71, %v71
    %v113 = vmin.f32 16.0, %v112
    %v114 = vmul.f32 %v113, 2.1237322e-06
    %v115 = vadd.f32 %v114, 0.00028619796
    %v116 = vmul.f32 %v113, %v115
    %v117 = vadd.f32 %v116, 0.0036580483
    %v118 = vmul.f32 %v113, %v117
    %v119 = vadd.f32 %v118, 0.05243302
    %v120 = vmul.f32 %v113, %v119
    %v121 = vadd.f32 %v120, 0.18741608
    %v122 = vmul.f32 %v113, %v121
    %v123 = vadd.f32 %v122, 1.1283791
    %v124 = vmul.f32 %v71, %v123
    %v125 = vmul.f32 %v113, 3.8918573e-05
    %v126 = vadd.f32 %v125, 0.001143296
    %v127 = vmul.f32 %v113, %v126
    %v128 = vadd.f32 %v127, 0.014752088
    %v129 = vmul.f32 %v113, %v128
    %v130 = vadd.f32 %v129, 0.112945676
    %v131 = vmul.f32 %v113, %v130
    %v132 = vadd.f32 %v131, 0.4994258
    %v133 = vmul.f32 %v113, %v132
    %v134 = vadd.f32 %v133, 1.0
    %v135 = vrcp.pop %v134
    %v136 = vmul.f32 %v134, %v135
    %v137 = vsub.f32 1.0, %v136
    %v138 = vmul.f32 %v135, %v137
    %v139 = vadd.f32 %v135, %v138
    %vm140 = vweird.f32 %v134
    %vm141 = vweird.f32 %v135
    %vm142 = vmor %vm140, %vm141
    %v143 = vsel %vm142, %v135, %v139
    %v144 = vand.u32 2147483647, %v134
    %vm145 = vcmp.eq.f32.partialorder %v144, 8.507059e+37
    %v146 = vand.u32 %v134, 2147483648
    %v147 = vor.u32 1.1754944e-38, %v146
    %v148 = vsel %vm145, %v147, %v143
    %v149 = vmul.f32 %v124, %v148
    %v150 = vmin.f32 %v149, 1.0
    %v151 = vmax.f32 %v150, -1.0
    %v152 = vadd.f32 %v111, 1.0
    %v153 = vadd.f32 %v151, 1.0
    %v154 = vmul.f32 %v68, %v152
    %v155 = vmul.f32 %v69, %v153
    %v156 = vld [vmem:[#allocation2] sm:$0xff]
    %v157 = vld [vmem:[#allocation2 + $0x8] sm:$0xff]
    %v158 = vld [vmem:[%s3] sm:$0xff]
    %v159 = vld [vmem:[%s3 + $0x8] sm:$0xff]
    %v160 = vld [vmem:[%s3 + $0x10] sm:$0xff]
    %v161 = vld [vmem:[%s3 + $0x18] sm:$0xff]
    %v162 = vld [vmem:[%s3 + $0x20] sm:$0xff]
    %v163 = vld [vmem:[%s3 + $0x28] sm:$0xff]
    %v164 = vld [vmem:[%s3 + $0x30] sm:$0xff]
    %v165 = vld [vmem:[%s3 + $0x38] sm:$0xff]
    %v166 = vld [vmem:[%s3 + $0x40] sm:$0xff]
    %v167 = vld [vmem:[%s3 + $0x48] sm:$0xff]
    %v168 = vld [vmem:[%s3 + $0x50] sm:$0xff]
    %v169 = vld [vmem:[%s3 + $0x58] sm:$0xff]
    %v170 = vld [vmem:[%s3 + $0x60] sm:$0xff]
    %v171 = vld [vmem:[%s3 + $0x68] sm:$0xff]
    %v172 = vld [vmem:[%s3 + $0x70] sm:$0xff]
    %v173 = vld [vmem:[%s3 + $0x78] sm:$0xff]
    %174 = vmatpush.msra.mxu0 %v173
    %175 = vmatpush.msra.mxu0 %v172
    %176 = vmatpush.msra.mxu0 %v171
    %177 = vmatpush.msra.mxu0 %v170
    %178 = vmatpush.msra.mxu0 %v169
    %179 = vmatpush.msra.mxu0 %v168
    %180 = vmatpush.msra.mxu0 %v167
    %181 = vmatpush.msra.mxu0 %v166
    %182 = vmatpush.msra.mxu0 %v165
    %183 = vmatpush.msra.mxu0 %v164
    %184 = vmatpush.msra.mxu0 %v163
    %185 = vmatpush.msra.mxu0 %v162
    %186 = vmatpush.msra.mxu0 %v161
    %187 = vmatpush.msra.mxu0 %v160
    %188 = vmatpush.msra.mxu0 %v159
    %189 = vmatpush.msra.mxu0 %v158
    %190 = vmatmul.f32.gmra.mxu0 %v154
    %v191 = vpop.f32.mrf.mxu0
    %v192 = vadd.f32 0.0, %v191
    %193 = vmatmul.f32.gmra.mxu0 %v155
    %v194 = vpop.f32.mrf.mxu0
    %v195 = vadd.f32 0.0, %v194
    %196 = vdwg.mxu0
    %v197 = vadd.f32 %v156, %v192
    %v198 = vadd.f32 %v157, %v195
    %199 = vst.msk [vmem:[#allocation2] sm:$0xff] %vm38, %v197
    %200 = vst.msk [vmem:[#allocation2 + $0x8] sm:$0xff] %vm38, %v198
    // Predicated region
    $region26: #{mlp_pallas.1} parent=1 // pred_check
      %p201 = pneg %p21
    $region27: #{mlp_pallas.1} parent=1 // pred_check_branch
      %203 = sbr.rel (%p201) target = $region29
    $region28: #{mlp_pallas.1} parent=1 // pred_region
      %v204 = vld [vmem:[#allocation2] sm:$0xff]
      %v205 = vld [vmem:[#allocation2 + $0x8] sm:$0xff]
      %v206 = vld [vmem:[%s4] sm:$0x1]
      %v208 = vperm.slane %v206, 0
      %v210 = vadd.f32 %v204, %v208
      %v211 = vadd.f32 %v205, %v208
      %212 = vst.msk [vmem:[#allocation3] sm:$0xff] %vm38, %v210
      %213 = vst.msk [vmem:[#allocation3 + $0x8] sm:$0xff] %vm38, %v211
    $region29: #{mlp_pallas.1} parent=1 // pred_fallthru
      _
    // Predicated region
    $region30: #{mlp_pallas.1} parent=1 // pred_check
      _
    $region31: #{mlp_pallas.1} parent=1 // pred_check_branch
      %215 = sbr.rel (0) target = $region33
    $region32: #{mlp_pallas.1} parent=1 // pred_region
      %217 = vsyncadd [#allocation4], 0
      %s218 = sshll.u32 [#allocation3], 4
      %s219 = int_to_ptr.vmem [resolvable:$true] %s218
      %s220 = sshll.u32 %s5, 4
      %s221 = int_to_ptr.hbm [resolvable:$true] %s220
      %226 = dma.vmem_to_hbm [thread:$0]  %s219, 256, %s221, [#allocation4], 128, 128, 8
    $region33: #{mlp_pallas.1} parent=1 // pred_fallthru
      _
    // Predicated region
    $region34: #{mlp_pallas.1} parent=1 // pred_check
      _
    $region35: #{mlp_pallas.1} parent=1 // pred_check_branch
      %228 = sbr.rel (0) target = $region37
    $region36: #{mlp_pallas.1} parent=1 // pred_region
      %230 = dma.done [#allocation4], 256
    $region37: #{mlp_pallas.1} parent=1 // pred_fallthru
      _
    %231 = vsyncpa [#allocation4], 1

</llo_original>
